<compile_context>
chip_gen: v6e
topology: v6e:2x2x1
jax: 0.10.0
libtpu: 0.0.40
codegen_flags: <defaults>
</compile_context>

<pallas_src>
import math

import jax
import jax.numpy as jnp
from jax.experimental import pallas as pl
from jax.experimental.pallas import tpu as pltpu


# ---------------------------------------------------------------------------
# Kernel
# ---------------------------------------------------------------------------

def _res_conv_kernel(alpha_ref, a_ref, x_ref, x0_ref, w_ref, b_ref, o_ref):
    """Grid = (row_tiles, k_tiles).

    o_ref (f32, block index constant over k) is the accumulator for A@X.
    On the last k step: in-place residual mix with X0, then one MXU matmul
    with the folded weight W' = beta*W^T + (1-beta)*I and bias b' = beta*b.
    """
    k = pl.program_id(1)

    @pl.when(k == 0)
    def _():
        o_ref[...] = jnp.zeros_like(o_ref)

    # bf16 x bf16 on the MXU, f32 accumulation straight into the resident
    # output block (no scratch accumulator needed).
    o_ref[...] += jnp.dot(a_ref[...], x_ref[...],
                          preferred_element_type=jnp.float32)

    @pl.when(k == pl.num_programs(1) - 1)
    def _():
        alpha = alpha_ref[0]
        # In-place residual mix -> no extra (tr, Fp) temporary in VMEM.
        o_ref[...] = (1.0 - alpha) * o_ref[...] + alpha * x0_ref[...]
        # Folded residual linear: one MXU matmul + bias.
        o_ref[...] = (jnp.dot(o_ref[...], w_ref[...],
                              preferred_element_type=jnp.float32)
                      + b_ref[...]).astype(o_ref.dtype)


# ---------------------------------------------------------------------------
# Wrapper
# ---------------------------------------------------------------------------

def _cdiv(a, b):
    return -(-a // b)


def _round_up(x, m):
    return _cdiv(x, m) * m


def _pad2(x, rows, cols):
    pr, pc = rows - x.shape[0], cols - x.shape[1]
    if pr == 0 and pc == 0:
        return x                      # avoid a pointless extra HBM copy
    return jnp.pad(x, ((0, pr), (0, pc)))


def _choose_tiles(N, block):
    """Pick (row tile tr, k tile tk, padded node count Np).

    TPU layout constraints on the A block (tr, tk):
      * tk (lane axis) must be a multiple of 128 or span the whole padded axis.
      * tr (sublane axis, bf16) kept a multiple of 16.
    Additionally: >= 2 row tiles whenever possible so the "parallel" grid axis
    can feed both v7x TensorCores, and padding of A kept minimal.
    """
    if N > block:
        nk = _cdiv(N, block)
        tk = _round_up(_cdiv(N, nk), 128)   # 512 for block=512: also a 256-multiple (v6e/v7x MXU)
        tr = tk                              # divides Np evenly by construction
        Np = _round_up(N, tk)
    else:
        nr = 2 if N >= 32 else 1             # keep both v7x cores busy when there is work
        tr = _round_up(_cdiv(N, nr), 16)
        Np = nr * tr
        tk = Np                              # single reduction step; lane = full axis
    return tr, tk, Np


def res_hgnn_conv(A, X, X0, W, b, alpha, beta, *, block=512):
    """ResHGNNConv.forward(X, A, alpha, beta, X0); W is [out_ft, in_ft], b [out_ft]."""
    N, F = X.shape
    assert A.shape == (N, N) and X0.shape == (N, F)
    assert W.shape == (F, F), "ResHGNNConv residual requires in_ft == out_ft"

    # Fold the transpose and the beta-residual into the weight once (host, O(F^2)):
    #   (1-beta)*Xi + beta*(Xi @ W^T + b)  ==  Xi @ (beta*W^T + (1-beta)*I) + beta*b
    # Note (1-beta) may be negative (GCNII-style beta > 1) -- that is intentional.
    w_eff = (beta * W.T.astype(jnp.float32)
             + (1.0 - beta) * jnp.eye(F, dtype=jnp.float32))
    b_eff = (beta * b.astype(jnp.float32)).reshape(1, F)

    Fp = _round_up(F, 128)
    tr, tk, Np = _choose_tiles(N, block)

    # bf16 streams for the bandwidth-dominant operands; f32 for the rest.
    A_p = _pad2(A.astype(jnp.bfloat16), Np, Np)
    X_p = _pad2(X.astype(jnp.bfloat16), Np, Fp)
    X0_p = _pad2(X0.astype(jnp.float32), Np, Fp)
    W_p = _pad2(w_eff, Fp, Fp)
    B_p = _pad2(b_eff, 1, Fp)
    alpha_arr = jnp.full((1,), alpha, dtype=jnp.float32)

    grid = (Np // tr, Np // tk)
    n_row = grid[0]

    # Advisory cost so XLA schedules neighbors (pads/slices, adjacent layers)
    # around the custom call.
    cost = pl.CostEstimate(
        flops=2 * Np * Np * Fp + 2 * Np * Fp * Fp,
        transcendentals=0,
        bytes_accessed=int(Np * Np * 2            # A (bf16), read once
                           + n_row * Np * Fp * 2  # X (bf16), re-read per row tile
                           + Np * Fp * 4          # X0 (f32)
                           + Fp * Fp * 4 + Fp * 4 # W', b'
                           + Np * Fp * 4))        # output

    # VMEM budget: double-buffered A/X/X0/out tiles + single-buffered W'/b'.
    vmem_need = (2 * tr * tk * 2 + 2 * tk * Fp * 2 + 2 * tr * Fp * 4
                 + 2 * tr * Fp * 4 + Fp * Fp * 4 + Fp * 4)
    vmem_limit = min(64 * 1024 * 1024,             # safe on all of v5e/v6e/v7x
                     max(32 * 1024 * 1024, int(vmem_need * 5 // 4)))

    out_p = pl.pallas_call(
        _res_conv_kernel,
        grid_spec=pltpu.PrefetchScalarGridSpec(
            num_scalar_prefetch=1,                 # alpha -> SMEM (one compile per stack)
            grid=grid,
            in_specs=[
                pl.BlockSpec((tr, tk), lambda i, k, s: (i, k)),   # A tile
                pl.BlockSpec((tk, Fp), lambda i, k, s: (k, 0)),   # X rows for this k-slab
                pl.BlockSpec((tr, Fp), lambda i, k, s: (i, 0)),   # X0 rows (resident over k)
                pl.BlockSpec((Fp, Fp), lambda i, k, s: (0, 0),    # folded weight, grid-invariant
                             pipeline_mode=pl.Buffered(1)),
                pl.BlockSpec((1, Fp), lambda i, k, s: (0, 0),     # folded bias, grid-invariant
                             pipeline_mode=pl.Buffered(1)),
            ],
            out_specs=pl.BlockSpec((tr, Fp), lambda i, k, s: (i, 0)),
        ),
        out_shape=jax.ShapeDtypeStruct((Np, Fp), jnp.float32),
        cost_estimate=cost,
        compiler_params=pltpu.CompilerParams(
            dimension_semantics=("parallel", "arbitrary"),
            vmem_limit_bytes=vmem_limit),
    )(alpha_arr, A_p, X_p, X0_p, W_p, B_p)

    # TODO(synk): for very large F on v7x (Fp >= ~2048), additionally tile the
    # output-feature axis and store W' in bf16; and emit bf16 output (keeping an
    # f32 scratch accumulator) when the consuming layer accepts it.
    return out_p[:N, :F]


# ---------------------------------------------------------------------------
# Main
# ---------------------------------------------------------------------------

if __name__ == "__main__":
    N, F = 64, 32
    alpha = 0.1
    beta = math.log(2.5 / 1.0 + 1.0)          # GCNII/ResHGNN-style beta for layer 1

    key = jax.random.PRNGKey(0)
    ka, kx, k0, kw, kb = jax.random.split(key, 5)

    # Synthetic symmetric, row-normalized hypergraph propagation matrix A.
    a = jax.random.uniform(ka, (N, N), jnp.float32)
    a = 0.5 * (a + a.T) + jnp.eye(N, dtype=jnp.float32)
    A = a / jnp.sum(a, axis=1, keepdims=True)

    X = jax.random.normal(kx, (N, F), jnp.float32)
    X0 = jax.random.normal(k0, (N, F), jnp.float32)

    # PyTorch nn.Linear-style init: W [out_ft, in_ft], b [out_ft].
    bound = 1.0 / math.sqrt(F)
    W = jax.random.uniform(kw, (F, F), jnp.float32, -bound, bound)
    b = jax.random.uniform(kb, (F,), jnp.float32, -bound, bound)

    out = res_hgnn_conv(A, X, X0, W, b, alpha, beta)
    jax.block_until_ready(out)

    # Pure-JAX reference of the PyTorch module's math, using the same bf16
    # quantization of A/X the kernel deliberately streams (f32 accumulation).
    Ab = A.astype(jnp.bfloat16).astype(jnp.float32)
    Xb = X.astype(jnp.bfloat16).astype(jnp.float32)
    hi = jax.lax.Precision.HIGHEST
    ax = jnp.dot(Ab, Xb, precision=hi)
    xi = (1.0 - alpha) * ax + alpha * X0
    ref = (1.0 - beta) * xi + beta * (jnp.dot(xi, W.T, precision=hi) + b)

    assert out.shape == (N, F)
    err = float(jnp.max(jnp.abs(out - ref)))
    assert bool(jnp.allclose(out, ref, atol=2e-2, rtol=2e-2)), err

    print("KERNEL_OK")
</pallas_src>

<mosaic_0001>
module attributes {stable_mosaic.version = 11 : i64} {
  func.func @_res_conv_kernel(%arg0: i32, %arg1: i32, %arg2: memref<1xf32, #tpu.memory_space<smem>>, %arg3: memref<32x64xbf16, #tpu.memory_space<vmem>>, %arg4: memref<64x128xbf16, #tpu.memory_space<vmem>>, %arg5: memref<32x128xf32, #tpu.memory_space<vmem>>, %arg6: memref<128x128xf32, #tpu.memory_space<vmem>>, %arg7: memref<1x128xf32, #tpu.memory_space<vmem>>, %arg8: memref<32x128xf32, #tpu.memory_space<vmem>>) attributes {dimension_semantics = [#tpu.dimension_semantics<parallel>, #tpu.dimension_semantics<arbitrary>], iteration_bounds = array<i64: 2, 1>, scalar_prefetch = 1 : i64, scratch_operands = 0 : i64, tpu.core_type = #tpu.core_type<tc>, window_params = [{transform_indices = @transform_0, window_bounds = array<i64: 32, 64>}, {transform_indices = @transform_1, window_bounds = array<i64: 64, 128>}, {transform_indices = @transform_2, window_bounds = array<i64: 32, 128>}, {pipeline_mode = #tpu.pipeline_mode<synchronous>, transform_indices = @transform_3, window_bounds = array<i64: 128, 128>}, {pipeline_mode = #tpu.pipeline_mode<synchronous>, transform_indices = @transform_4, window_bounds = array<i64: 1, 128>}, {transform_indices = @transform_5, window_bounds = array<i64: 32, 128>}]} {
    %c0_i32 = arith.constant 0 : i32
    %0 = arith.cmpi eq, %arg1, %c0_i32 : i32
    %1 = arith.extui %0 : i1 to i32
    %c0_i32_0 = arith.constant 0 : i32
    %2 = arith.cmpi ne, %1, %c0_i32_0 : i32
    scf.if %2 {
      %cst_10 = arith.constant 0.000000e+00 : f32
      %12 = vector.broadcast %cst_10 : f32 to vector<32x128xf32>
      %c0_11 = arith.constant 0 : index
      %c0_12 = arith.constant 0 : index
      %13 = vector.load %arg8[%c0_11, %c0_12] : memref<32x128xf32, #tpu.memory_space<vmem>>, vector<32x128xf32>
      tpu.vector_store %arg8[%c0_11, %c0_12], %12 {strides = array<i32>} : memref<32x128xf32, #tpu.memory_space<vmem>>, vector<32x128xf32>,
    } else {
    }
    %c0 = arith.constant 0 : index
    %c0_1 = arith.constant 0 : index
    %3 = vector.load %arg8[%c0, %c0_1] : memref<32x128xf32, #tpu.memory_space<vmem>>, vector<32x128xf32>
    %c0_2 = arith.constant 0 : index
    %c0_3 = arith.constant 0 : index
    %4 = vector.load %arg3[%c0_2, %c0_3] : memref<32x64xbf16, #tpu.memory_space<vmem>>, vector<32x64xbf16>
    %c0_4 = arith.constant 0 : index
    %c0_5 = arith.constant 0 : index
    %5 = vector.load %arg4[%c0_4, %c0_5] : memref<64x128xbf16, #tpu.memory_space<vmem>>, vector<64x128xbf16>
    %cst = arith.constant dense<0.000000e+00> : vector<32x128xf32>
    %6 = tpu.matmul %4, %5, %cst {dimension_numbers = #tpu.dot_dimension_numbers<[1], [0], [0], [1], [0, 0, 1, 1], [], []>} : vector<32x64xbf16>, vector<64x128xbf16>, vector<32x128xf32> -> vector<32x128xf32>
    %7 = arith.addf %3, %6 : vector<32x128xf32>
    %c0_6 = arith.constant 0 : index
    %c0_7 = arith.constant 0 : index
    %8 = vector.load %arg8[%c0_6, %c0_7] : memref<32x128xf32, #tpu.memory_space<vmem>>, vector<32x128xf32>
    tpu.vector_store %arg8[%c0_6, %c0_7], %7 {strides = array<i32>} : memref<32x128xf32, #tpu.memory_space<vmem>>, vector<32x128xf32>,
    %c0_i32_8 = arith.constant 0 : i32
    %9 = arith.cmpi eq, %arg1, %c0_i32_8 : i32
    %10 = arith.extui %9 : i1 to i32
    %c0_i32_9 = arith.constant 0 : i32
    %11 = arith.cmpi ne, %10, %c0_i32_9 : i32
    scf.if %11 {
      %c0_10 = arith.constant 0 : index
      %12 = memref.load %arg2[%c0_10] : memref<1xf32, #tpu.memory_space<smem>>
      %cst_11 = arith.constant 1.000000e+00 : f32
      %13 = arith.subf %cst_11, %12 : f32
      %c0_12 = arith.constant 0 : index
      %c0_13 = arith.constant 0 : index
      %14 = vector.load %arg8[%c0_12, %c0_13] : memref<32x128xf32, #tpu.memory_space<vmem>>, vector<32x128xf32>
      %15 = vector.broadcast %13 : f32 to vector<32x128xf32>
      %16 = arith.mulf %15, %14 : vector<32x128xf32>
      %c0_14 = arith.constant 0 : index
      %c0_15 = arith.constant 0 : index
      %17 = vector.load %arg5[%c0_14, %c0_15] : memref<32x128xf32, #tpu.memory_space<vmem>>, vector<32x128xf32>
      %18 = vector.broadcast %12 : f32 to vector<32x128xf32>
      %19 = arith.mulf %18, %17 : vector<32x128xf32>
      %20 = arith.addf %16, %19 : vector<32x128xf32>
      %c0_16 = arith.constant 0 : index
      %c0_17 = arith.constant 0 : index
      %21 = vector.load %arg8[%c0_16, %c0_17] : memref<32x128xf32, #tpu.memory_space<vmem>>, vector<32x128xf32>
      tpu.vector_store %arg8[%c0_16, %c0_17], %20 {strides = array<i32>} : memref<32x128xf32, #tpu.memory_space<vmem>>, vector<32x128xf32>,
      %c0_18 = arith.constant 0 : index
      %c0_19 = arith.constant 0 : index
      %22 = vector.load %arg8[%c0_18, %c0_19] : memref<32x128xf32, #tpu.memory_space<vmem>>, vector<32x128xf32>
      %c0_20 = arith.constant 0 : index
      %c0_21 = arith.constant 0 : index
      %23 = vector.load %arg6[%c0_20, %c0_21] : memref<128x128xf32, #tpu.memory_space<vmem>>, vector<128x128xf32>
      %cst_22 = arith.constant dense<0.000000e+00> : vector<32x128xf32>
      %24 = tpu.matmul %22, %23, %cst_22 {dimension_numbers = #tpu.dot_dimension_numbers<[1], [0], [0], [1], [0, 0, 1, 1], [], []>} : vector<32x128xf32>, vector<128x128xf32>, vector<32x128xf32> -> vector<32x128xf32>
      %c0_23 = arith.constant 0 : index
      %c0_24 = arith.constant 0 : index
      %25 = vector.load %arg7[%c0_23, %c0_24] : memref<1x128xf32, #tpu.memory_space<vmem>>, vector<1x128xf32>
      %26 = vector.broadcast %25 : vector<1x128xf32> to vector<32x128xf32>
      %27 = arith.addf %24, %26 : vector<32x128xf32>
      %c0_25 = arith.constant 0 : index
      %c0_26 = arith.constant 0 : index
      %28 = vector.load %arg8[%c0_25, %c0_26] : memref<32x128xf32, #tpu.memory_space<vmem>>, vector<32x128xf32>
      tpu.vector_store %arg8[%c0_25, %c0_26], %27 {strides = array<i32>} : memref<32x128xf32, #tpu.memory_space<vmem>>, vector<32x128xf32>,
    } else {
    }
    return
  }
  func.func @transform_0(%arg0: i32, %arg1: i32, %arg2: memref<1xf32, #tpu.memory_space<smem>>) -> (i32, i32) {
    %c0_i32 = arith.constant 0 : i32
    return %arg0, %arg1 : i32, i32
  }
  func.func @transform_1(%arg0: i32, %arg1: i32, %arg2: memref<1xf32, #tpu.memory_space<smem>>) -> (i32, i32) {
    %c0_i32 = arith.constant 0 : i32
    %c0_i32_0 = arith.constant 0 : i32
    return %arg1, %c0_i32 : i32, i32
  }
  func.func @transform_2(%arg0: i32, %arg1: i32, %arg2: memref<1xf32, #tpu.memory_space<smem>>) -> (i32, i32) {
    %c0_i32 = arith.constant 0 : i32
    %c0_i32_0 = arith.constant 0 : i32
    return %arg0, %c0_i32 : i32, i32
  }
  func.func @transform_3(%arg0: i32, %arg1: i32, %arg2: memref<1xf32, #tpu.memory_space<smem>>) -> (i32, i32) {
    %c0_i32 = arith.constant 0 : i32
    %c0_i32_0 = arith.constant 0 : i32
    %c0_i32_1 = arith.constant 0 : i32
    return %c0_i32, %c0_i32_0 : i32, i32
  }
  func.func @transform_4(%arg0: i32, %arg1: i32, %arg2: memref<1xf32, #tpu.memory_space<smem>>) -> (i32, i32) {
    %c0_i32 = arith.constant 0 : i32
    %c0_i32_0 = arith.constant 0 : i32
    %c0_i32_1 = arith.constant 0 : i32
    return %c0_i32, %c0_i32_0 : i32, i32
  }
  func.func @transform_5(%arg0: i32, %arg1: i32, %arg2: memref<1xf32, #tpu.memory_space<smem>>) -> (i32, i32) {
    %c0_i32 = arith.constant 0 : i32
    %c0_i32_0 = arith.constant 0 : i32
    return %arg0, %c0_i32 : i32, i32
  }
}

</mosaic_0001>

<llo_original>
// kernel: tpu_custom_call.1
$region0: #{tpu_custom_call.1}
  #allocation0 [shape = 'u32[]', space=smem, size = 0x4, offset = 0x4, fixed_abs, tag = 'smem constant byte address 0x4 - core index']
  #allocation1 [shape = 'u32[144,128]{1,0:T(1,128)}', space=vmem, size = 0x12000, scoped, tag = 'internal scratch']
  #allocation2 [shape = 's32[1]{0}', space=sflag, size = 0x4, scoped, tag = 'scoped memory for tpu_custom_call.1']
  #allocation3 [shape = 'f32[1]{0:T(128)S(6)}', space=smem, size = 0x200, scoped, tag = 'prefetched SMEM operand 0']
  %s0 = inlined_call_operand.<no memory space> [shape: f32[1], index: 0, kind: input, shape index: {}]
  %s1 = inlined_call_operand.hbm [shape: bf16[64,64], index: 1, kind: input, shape index: {}]
  %s2 = inlined_call_operand.hbm [shape: bf16[64,128], index: 2, kind: input, shape index: {}]
  %s3 = inlined_call_operand.hbm [shape: f32[64,128], index: 3, kind: input, shape index: {}]
  %s4 = inlined_call_operand.hbm [shape: f32[128,128], index: 4, kind: input, shape index: {}]
  %s5 = inlined_call_operand.vmem [shape: f32[1,128], index: 5, kind: input, shape index: {}]
  %s6 = inlined_call_operand.hbm [shape: f32[64,128], index: 6, kind: output, shape index: {}]
  %s7 = sld [smem:[#allocation0]]
  $region77: #{tpu_custom_call.1} parent=0
    _
  %s9 = ssub.s32 1, %s7
  %s10 = scalar_select 0, %s9, %s7
  %11 = sst [smem:[#allocation3]] %s0
  $region1: #{tpu_custom_call.1} parent=0
    #allocation4 [shape = 'u8[16384]{0}', space=vmem, size = 0x4000, scoped, tag = 'input window, operand 1']
    #allocation5 [shape = 's32[2]{0}', space=sflag, size = 0x8, scoped, tag = 'scoped memory for tpu_custom_call.1']
    #allocation6 [shape = 's32[2]{0}', space=sflag, size = 0x8, scoped, tag = 'scoped memory for tpu_custom_call.1']
    #allocation7 [shape = 'u8[16384]{0}', space=vmem, size = 0x4000, scoped, tag = 'input window, operand 2, single buffered']
    #allocation8 [shape = 's32[1]{0}', space=sflag, size = 0x4, scoped, tag = 'scoped memory for tpu_custom_call.1']
    #allocation9 [shape = 'u8[32768]{0}', space=vmem, size = 0x8000, scoped, tag = 'input window, operand 3']
    #allocation10 [shape = 'u8[65536]{0}', space=vmem, size = 0x10000, scoped, tag = 'input window, operand 4, single buffered']
    #allocation11 [shape = 'u8[32768]{0}', space=vmem, size = 0x8000, scoped, tag = 'output window, operand 0']
    %12 = vsyncpa [#allocation5], 0
    %s13 = scalar_lea.sflag [#allocation5], 1
    %14 = vsyncpa %s13, 0
    %15 = vsyncpa [#allocation8], 0
    %16 = vsyncpa [#allocation6], 0
    %s17 = scalar_lea.sflag [#allocation6], 1
    %18 = vsyncpa %s17, 0
    loop: start=0, step=1, limit=4
    $region2: #{tpu_custom_call.1} parent=1 // loop_pre_header
      _
    $region3: #{tpu_custom_call.1} parent=1 // loop_header
      %s20 = sphi 0, %s24
      %p21 = scmp.ge.s32.totalorder %s20, 4
      %s27 = sphi 0, %s39
      %s28 = sphi 0, %s35
      %s29 = sphi 0, %s27
      %s30 = sphi 0, %s28
      %s31 = sphi 0, %s29
      %s32 = sphi 0, %s30
      %s44 = sphi 0, %s46
      %s47 = sphi 0, %s44
      %s48 = sphi 0, %s47
      %s64 = sphi 0, %s48
      %s70 = sphi 0, %s72
      %s73 = sphi 0, %s70
      %s74 = sphi 0, %s73
      %s90 = sphi 0, %s74
      %s96 = sphi 0, %s98
      %s99 = sphi 0, %s96
      %s100 = sphi 0, %s99
      %s116 = sphi 0, %s100
      %s120 = sphi 0, %s120
      %s122 = sphi 0, %s120
      %s123 = sphi 0, %s122
      %s137 = sphi 0, %s123
      %s141 = sphi 0, %s141
      %s143 = sphi 0, %s141
      %s144 = sphi 0, %s143
      %s158 = sphi 0, %s144
      %s164 = sphi 0, %s166
      %s167 = sphi 0, %s164
      %s168 = sphi 0, %s167
      %s184 = sphi 0, %s168
    $region4: #{tpu_custom_call.1} parent=1 // loop_header_branch
      %23 = sbr.rel (%p21) target = $region8
    $region5: #{tpu_custom_call.1} parent=1 // loop_body
      %s25 = ssub.s32 %s20, 1
      %s26 = ssub.s32 %s20, 2
      %s33 = sadd.s32 1, %s28
      %p34 = scmp.ge.s32.totalorder %s33, 1
      %s35 = scalar_select %p34, 0, %s33
      %s36 = sadd.s32 1, %s27
      %s37 = scalar_select %p34, %s36, %s27
      %p38 = scmp.ge.s32.totalorder %s37, 2
      %s39 = scalar_select %p38, 0, %s37
      %s40 = ssub.s32 %s27, %s39
      %s41 = ssub.s32 %s28, %s35
      %s42 = sor.u32 %s40, %s41
      %p43 = scmp.eq.s32.totalorder %s42, 0
      %s45 = sadd.s32 %s44, 1
      %s46 = scalar_select %p43, %s44, %s45
      %p49 = pneg %p43
      %p50 = scmp.eq.s32.totalorder %s20, 1
      %p51 = por %p49, %p50
      %p52 = scmp.ne.s32.totalorder %s44, %s47
      %p53 = scmp.eq.s32.totalorder %s20, 0
      %p54 = por %p52, %p53
      %p55 = scmp.ne.s32.totalorder %s44, %s47
      %p56 = scmp.eq.s32.totalorder %s25, 1
      %p57 = por %p55, %p56
      %p58 = scmp.ne.s32.totalorder %s47, %s48
      %p59 = scmp.eq.s32.totalorder %s25, 0
      %p60 = por %p58, %p59
      %p61 = scmp.ne.s32.totalorder %s47, %s48
      %p62 = scmp.eq.s32.totalorder %s26, 1
      %p63 = por %p61, %p62
      %p65 = scmp.ne.s32.totalorder %s48, %s64
      %p66 = scmp.eq.s32.totalorder %s26, 0
      %p67 = por %p65, %p66
      %s68 = ssub.s32 %s28, %s35
      %p69 = scmp.eq.s32.totalorder %s68, 0
      %s71 = sadd.s32 %s70, 1
      %s72 = scalar_select %p69, %s70, %s71
      %p75 = pneg %p69
      %p76 = scmp.eq.s32.totalorder %s20, 1
      %p77 = por %p75, %p76
      %p78 = scmp.ne.s32.totalorder %s70, %s73
      %p79 = scmp.eq.s32.totalorder %s20, 0
      %p80 = por %p78, %p79
      %p81 = scmp.ne.s32.totalorder %s70, %s73
      %p82 = scmp.eq.s32.totalorder %s25, 1
      %p83 = por %p81, %p82
      %p84 = scmp.ne.s32.totalorder %s73, %s74
      %p85 = scmp.eq.s32.totalorder %s25, 0
      %p86 = por %p84, %p85
      %p87 = scmp.ne.s32.totalorder %s73, %s74
      %p88 = scmp.eq.s32.totalorder %s26, 1
      %p89 = por %p87, %p88
      %p91 = scmp.ne.s32.totalorder %s74, %s90
      %p92 = scmp.eq.s32.totalorder %s26, 0
      %p93 = por %p91, %p92
      %s94 = ssub.s32 %s27, %s39
      %p95 = scmp.eq.s32.totalorder %s94, 0
      %s97 = sadd.s32 %s96, 1
      %s98 = scalar_select %p95, %s96, %s97
      %p101 = pneg %p95
      %p102 = scmp.eq.s32.totalorder %s20, 1
      %p103 = por %p101, %p102
      %p104 = scmp.ne.s32.totalorder %s96, %s99
      %p105 = scmp.eq.s32.totalorder %s20, 0
      %p106 = por %p104, %p105
      %p107 = scmp.ne.s32.totalorder %s96, %s99
      %p108 = scmp.eq.s32.totalorder %s25, 1
      %p109 = por %p107, %p108
      %p110 = scmp.ne.s32.totalorder %s99, %s100
      %p111 = scmp.eq.s32.totalorder %s25, 0
      %p112 = por %p110, %p111
      %p113 = scmp.ne.s32.totalorder %s99, %s100
      %p114 = scmp.eq.s32.totalorder %s26, 1
      %p115 = por %p113, %p114
      %p117 = scmp.ne.s32.totalorder %s100, %s116
      %p118 = scmp.eq.s32.totalorder %s26, 0
      %p119 = por %p117, %p118
      %s121 = sadd.s32 %s120, 1
      %p124 = scmp.eq.s32.totalorder %s20, 1
      %p125 = scmp.ne.s32.totalorder %s120, %s122
      %p126 = scmp.eq.s32.totalorder %s20, 0
      %p127 = por %p125, %p126
      %p128 = scmp.ne.s32.totalorder %s120, %s122
      %p129 = scmp.eq.s32.totalorder %s25, 1
      %p130 = por %p128, %p129
      %p131 = scmp.ne.s32.totalorder %s122, %s123
      %p132 = scmp.eq.s32.totalorder %s25, 0
      %p133 = por %p131, %p132
      %p134 = scmp.ne.s32.totalorder %s122, %s123
      %p135 = scmp.eq.s32.totalorder %s26, 1
      %p136 = por %p134, %p135
      %p138 = scmp.ne.s32.totalorder %s123, %s137
      %p139 = scmp.eq.s32.totalorder %s26, 0
      %p140 = por %p138, %p139
      %s142 = sadd.s32 %s141, 1
      %p145 = scmp.eq.s32.totalorder %s20, 1
      %p146 = scmp.ne.s32.totalorder %s141, %s143
      %p147 = scmp.eq.s32.totalorder %s20, 0
      %p148 = por %p146, %p147
      %p149 = scmp.ne.s32.totalorder %s141, %s143
      %p150 = scmp.eq.s32.totalorder %s25, 1
      %p151 = por %p149, %p150
      %p152 = scmp.ne.s32.totalorder %s143, %s144
      %p153 = scmp.eq.s32.totalorder %s25, 0
      %p154 = por %p152, %p153
      %p155 = scmp.ne.s32.totalorder %s143, %s144
      %p156 = scmp.eq.s32.totalorder %s26, 1
      %p157 = por %p155, %p156
      %p159 = scmp.ne.s32.totalorder %s144, %s158
      %p160 = scmp.eq.s32.totalorder %s26, 0
      %p161 = por %p159, %p160
      %s162 = ssub.s32 %s27, %s39
      %p163 = scmp.eq.s32.totalorder %s162, 0
      %s165 = sadd.s32 %s164, 1
      %s166 = scalar_select %p163, %s164, %s165
      %p169 = pneg %p163
      %p170 = scmp.eq.s32.totalorder %s20, 1
      %p171 = por %p169, %p170
      %p172 = scmp.ne.s32.totalorder %s164, %s167
      %p173 = scmp.eq.s32.totalorder %s20, 0
      %p174 = por %p172, %p173
      %p175 = scmp.ne.s32.totalorder %s164, %s167
      %p176 = scmp.eq.s32.totalorder %s25, 1
      %p177 = por %p175, %p176
      %p178 = scmp.ne.s32.totalorder %s167, %s168
      %p179 = scmp.eq.s32.totalorder %s25, 0
      %p180 = por %p178, %p179
      %p181 = scmp.ne.s32.totalorder %s167, %s168
      %p182 = scmp.eq.s32.totalorder %s26, 1
      %p183 = por %p181, %p182
      %p185 = scmp.ne.s32.totalorder %s168, %s184
      %p186 = scmp.eq.s32.totalorder %s26, 0
      %p187 = por %p185, %p186
      %p188 = scmp.le.s32.totalorder 1, %s20
      %p189 = scmp.lt.s32.totalorder %s20, 3
      %p190 = pnand %p188, %p189
      %p191 = pneg %p190
      // Predicated region
      $region9: #{tpu_custom_call.1} parent=5 // pred_check
        _
      $region10: #{tpu_custom_call.1} parent=5 // pred_check_branch
        %193 = sbr.rel (%p190) target = $region12
      $region11: #{tpu_custom_call.1} parent=5 // pred_region
        %s194 = ssub.s32 %s20, 1
        // Predicated region
        $region13: #{tpu_custom_call.1} parent=11 // pred_check
          %p195 = pneg %p86
        $region14: #{tpu_custom_call.1} parent=11 // pred_check_branch
          %197 = sbr.rel (%p195) target = $region16
        $region15: #{tpu_custom_call.1} parent=11 // pred_region
          %s198 = smul.u32 8, %s30
          %s200 = ssub.s32 512, 512
          %201 = vsyncadd [#allocation8], %s200
          %s202 = smul.addr %s198, 64
          %s203 = scalar_lea.hbm %s2, %s202
          %s204 = sshll.u32 [#allocation7], 4
          %s205 = int_to_ptr.vmem [resolvable:$true] %s204
          %210 = dma.hbm_to_vmem [thread:$0]  %s203, 512, %s205, [#allocation8], 64, 64, 4
        $region16: #{tpu_custom_call.1} parent=11 // pred_fallthru
          _
        // Predicated region
        $region17: #{tpu_custom_call.1} parent=11 // pred_check
          %p211 = pneg %p133
        $region18: #{tpu_custom_call.1} parent=11 // pred_check_branch
          %213 = sbr.rel (%p211) target = $region20
        $region19: #{tpu_custom_call.1} parent=11 // pred_region
          %s215 = ssub.s32 2048, 2048
          %216 = vsyncadd [#allocation8], %s215
          %s217 = sshll.u32 [#allocation10], 4
          %s218 = int_to_ptr.vmem [resolvable:$true] %s217
          %223 = dma.hbm_to_vmem [thread:$0]  %s4, 2048, %s218, [#allocation8], 128, 128, 8
        $region20: #{tpu_custom_call.1} parent=11 // pred_fallthru
          _
        // Predicated region
        $region21: #{tpu_custom_call.1} parent=11 // pred_check
          %p224 = pneg %p154
        $region22: #{tpu_custom_call.1} parent=11 // pred_check_branch
          %226 = sbr.rel (%p224) target = $region24
        $region23: #{tpu_custom_call.1} parent=11 // pred_region
          _
        $region24: #{tpu_custom_call.1} parent=11 // pred_fallthru
          _
      $region12: #{tpu_custom_call.1} parent=5 // pred_fallthru
        _
      %p227 = scmp.lt.s32.totalorder %s20, 2
      // Predicated region
      $region25: #{tpu_custom_call.1} parent=5 // pred_check
        %p228 = pneg %p227
      $region26: #{tpu_custom_call.1} parent=5 // pred_check_branch
        %230 = sbr.rel (%p228) target = $region28
      $region27: #{tpu_custom_call.1} parent=5 // pred_region
        // Predicated region
        $region29: #{tpu_custom_call.1} parent=27 // pred_check
          %p231 = pneg %p54
        $region30: #{tpu_custom_call.1} parent=27 // pred_check_branch
          %233 = sbr.rel (%p231) target = $region32
        $region31: #{tpu_custom_call.1} parent=27 // pred_region
          %s234 = sand.u32 %s20, 1
          %s235 = scalar_lea.sflag [#allocation5], %s234
          %s236 = sand.u32 %s44, 1
          %s237 = smul.addr %s236, 16
          %s238 = scalar_lea.vmem [#allocation4], %s237
          %s239 = smul.u32 4, %s27
          %s241 = ssub.s32 256, 256
          %242 = vsyncadd %s235, %s241
          %s243 = sadd.s32 %s28, %s239
          %s244 = smul.addr %s243, 64
          %s245 = scalar_lea.hbm %s1, %s244
          %s246 = sshll.u32 %s238, 4
          %s247 = int_to_ptr.vmem [resolvable:$true] %s246
          %252 = dma.hbm_to_vmem [thread:$0]  %s245, 256, %s247, %s235, 64, 64, 4
        $region32: #{tpu_custom_call.1} parent=27 // pred_fallthru
          _
        // Predicated region
        $region33: #{tpu_custom_call.1} parent=27 // pred_check
          %p253 = pneg %p106
        $region34: #{tpu_custom_call.1} parent=27 // pred_check_branch
          %255 = sbr.rel (%p253) target = $region36
        $region35: #{tpu_custom_call.1} parent=27 // pred_region
          %s256 = sand.u32 %s20, 1
          %s257 = scalar_lea.sflag [#allocation5], %s256
          %s258 = sand.u32 %s96, 1
          %s259 = smul.addr %s258, 32
          %s260 = scalar_lea.vmem [#allocation9], %s259
          %s261 = smul.u32 4, %s27
          %s263 = ssub.s32 512, 512
          %264 = vsyncadd %s257, %s263
          %s265 = smul.addr %s261, 128
          %s266 = scalar_lea.hbm %s3, %s265
          %s267 = sshll.u32 %s260, 4
          %s268 = int_to_ptr.vmem [resolvable:$true] %s267
          %273 = dma.hbm_to_vmem [thread:$0]  %s266, 512, %s268, %s257, 128, 128, 8
        $region36: #{tpu_custom_call.1} parent=27 // pred_fallthru
          _
      $region28: #{tpu_custom_call.1} parent=5 // pred_fallthru
        _
      %p274 = scmp.le.s32.totalorder 1, %s20
      %p275 = scmp.lt.s32.totalorder %s20, 3
      %p276 = pnand %p274, %p275
      %p277 = pneg %p276
      // Predicated region
      $region37: #{tpu_custom_call.1} parent=5 // pred_check
        _
      $region38: #{tpu_custom_call.1} parent=5 // pred_check_branch
        %279 = sbr.rel (%p276) target = $region40
      $region39: #{tpu_custom_call.1} parent=5 // pred_region
        %s280 = ssub.s32 %s20, 1
        %s281 = sand.u32 %s25, 1
        %s282 = scalar_lea.sflag [#allocation5], %s281
        %s283 = sand.u32 %s47, 1
        %s284 = smul.addr %s283, 16
        %s285 = scalar_lea.vmem [#allocation4], %s284
        // Predicated region
        $region41: #{tpu_custom_call.1} parent=39 // pred_check
          %p286 = pneg %p60
        $region42: #{tpu_custom_call.1} parent=39 // pred_check_branch
          %288 = sbr.rel (%p286) target = $region44
        $region43: #{tpu_custom_call.1} parent=39 // pred_region
          %289 = dma.done %s282, 256
        $region44: #{tpu_custom_call.1} parent=39 // pred_fallthru
          _
        // Predicated region
        $region45: #{tpu_custom_call.1} parent=39 // pred_check
          %p290 = pneg %p86
        $region46: #{tpu_custom_call.1} parent=39 // pred_check_branch
          %292 = sbr.rel (%p290) target = $region48
        $region47: #{tpu_custom_call.1} parent=39 // pred_region
          %293 = dma.done [#allocation8], 512
        $region48: #{tpu_custom_call.1} parent=39 // pred_fallthru
          _
        %s294 = sand.u32 %s25, 1
        %s295 = scalar_lea.sflag [#allocation5], %s294
        %s296 = sand.u32 %s99, 1
        %s297 = smul.addr %s296, 32
        %s298 = scalar_lea.vmem [#allocation9], %s297
        // Predicated region
        $region49: #{tpu_custom_call.1} parent=39 // pred_check
          %p299 = pneg %p112
        $region50: #{tpu_custom_call.1} parent=39 // pred_check_branch
          %301 = sbr.rel (%p299) target = $region52
        $region51: #{tpu_custom_call.1} parent=39 // pred_region
          %302 = dma.done %s295, 512
        $region52: #{tpu_custom_call.1} parent=39 // pred_fallthru
          _
        // Predicated region
        $region53: #{tpu_custom_call.1} parent=39 // pred_check
          %p303 = pneg %p133
        $region54: #{tpu_custom_call.1} parent=39 // pred_check_branch
          %305 = sbr.rel (%p303) target = $region56
        $region55: #{tpu_custom_call.1} parent=39 // pred_region
          %306 = dma.done [#allocation8], 2048
        $region56: #{tpu_custom_call.1} parent=39 // pred_fallthru
          _
        %s307 = sand.u32 %s25, 1
        %s308 = scalar_lea.sflag [#allocation5], %s307
        %s309 = sand.u32 %s47, 1
        %s310 = smul.addr %s309, 16
        %s311 = scalar_lea.vmem [#allocation4], %s310
        %p312 = pneg %p60
        %p313 = pneg %p57
        %p314 = pneg %p86
        %p315 = pneg %p83
        %s316 = sand.u32 %s25, 1
        %s317 = scalar_lea.sflag [#allocation5], %s316
        %s318 = sand.u32 %s99, 1
        %s319 = smul.addr %s318, 32
        %s320 = scalar_lea.vmem [#allocation9], %s319
        %p321 = pneg %p112
        %p322 = pneg %p109
        %p323 = pneg %p133
        %p324 = pneg %p130
        %p325 = pneg %p154
        %p326 = pneg %p151
        %p327 = pneg %p180
        %p328 = pneg %p177
        %s329 = sand.u32 %s167, 1
        %s330 = scalar_lea.sflag [#allocation6], %s329
        %s331 = sand.u32 %s167, 1
        %s332 = smul.addr %s331, 32
        %s333 = scalar_lea.vmem [#allocation11], %s332
        %s334 = smul.u32 4, %s29
        %s335 = smul.u32 8, %s30
        %s336 = smul.u32 4, %s29
        %s337 = smul.u32 4, %s29
        %p339 = scmp.eq.s32.totalorder %s30, 0
        // Predicated region
        $region57: #{tpu_custom_call.1} parent=39 // pred_check
          %p340 = pneg %p339
        $region58: #{tpu_custom_call.1} parent=39 // pred_check_branch
          %342 = sbr.rel (%p340) target = $region60
        $region59: #{tpu_custom_call.1} parent=39 // pred_region
          %343 = vst [vmem:[%s333] sm:$0xff] 0.0
          %344 = vst [vmem:[%s333 + $0x8] sm:$0xff] 0.0
          %345 = vst [vmem:[%s333 + $0x10] sm:$0xff] 0.0
          %346 = vst [vmem:[%s333 + $0x18] sm:$0xff] 0.0
        $region60: #{tpu_custom_call.1} parent=39 // pred_fallthru
          _
        %v347 = vld [vmem:[%s333] sm:$0xff]
        %v348 = vld [vmem:[%s333 + $0x8] sm:$0xff]
        %v349 = vld [vmem:[%s333 + $0x10] sm:$0xff]
        %v350 = vld [vmem:[%s333 + $0x18] sm:$0xff]
        %v351 = vld [vmem:[%s285] sm:$0xf]
        %v352 = vld [vmem:[%s285 + $0x4] sm:$0xf]
        %v353 = vld [vmem:[%s285 + $0x8] sm:$0xf]
        %v354 = vld [vmem:[%s285 + $0xc] sm:$0xf]
        %v355 = vld [vmem:[#allocation7] sm:$0xf]
        %v356 = vld [vmem:[#allocation7 + $0x4] sm:$0xf]
        %v357 = vld [vmem:[#allocation7 + $0x8] sm:$0xf]
        %v358 = vld [vmem:[#allocation7 + $0xc] sm:$0xf]
        %v359 = vld [vmem:[#allocation7 + $0x10] sm:$0xf]
        %v360 = vld [vmem:[#allocation7 + $0x14] sm:$0xf]
        %v361 = vld [vmem:[#allocation7 + $0x18] sm:$0xf]
        %v362 = vld [vmem:[#allocation7 + $0x1c] sm:$0xf]
        %v367 = vunpack.c.l.b16 %v351
        %v368 = vunpack.c.l.b16 %v352
        %v369 = vunpack.c.l.b16 %v353
        %v370 = vunpack.c.l.b16 %v354
        %v371 = vpack.c.b16 %v368, %v367
        %v372 = vpack.c.b16 %v370, %v369
        %v381 = vunpack.c.l.b16 %v355
        %v382 = vunpack.c.l.b16 %v356
        %v383 = vunpack.c.l.b16 %v357
        %v384 = vunpack.c.l.b16 %v358
        %v385 = vunpack.c.l.b16 %v359
        %v386 = vunpack.c.l.b16 %v360
        %v387 = vunpack.c.l.b16 %v361
        %v388 = vunpack.c.l.b16 %v362
        %v389 = vpack.c.b16 %v382, %v381
        %v390 = vpack.c.b16 %v384, %v383
        %v391 = vpack.c.b16 %v386, %v385
        %v392 = vpack.c.b16 %v388, %v387
        %vm397 = vcmask 523264
        %v399 = vsel %vm397, %v371, 0
        %v402 = vsel %vm397, %v372, 0
        %404 = vmatprep.subr.bf16.mxu0 0
        %405 = vmatpush1.bf16.msra.mxu0 0
        %406 = vmatprep.subr.bf16.mxu0 0
        %407 = vmatpush1.bf16.msra.mxu0 0
        %408 = vmatprep.subr.bf16.mxu0 0
        %409 = vmatpush1.bf16.msra.mxu0 0
        %410 = vmatprep.subr.bf16.mxu0 0
        %411 = vmatpush1.bf16.msra.mxu0 0
        %412 = vmatprep.subr.bf16.mxu0 0
        %413 = vmatpush1.bf16.msra.mxu0 %v392
        %414 = vmatprep.subr.bf16.mxu0 0
        %415 = vmatpush1.bf16.msra.mxu0 %v391
        %416 = vmatprep.subr.bf16.mxu0 0
        %417 = vmatpush1.bf16.msra.mxu0 %v390
        %418 = vmatprep.subr.bf16.mxu0 0
        %419 = vmatpush1.bf16.msra.mxu0 %v389
        %420 = vmatprep.subr.bf16.mxu0 0
        %421 = vmatpush2.bf16.msra.mxu0 0
        %422 = vmatprep.subr.bf16.mxu0 0
        %423 = vmatpush2.bf16.msra.mxu0 0
        %424 = vmatprep.subr.bf16.mxu0 0
        %425 = vmatpush2.bf16.msra.mxu0 0
        %426 = vmatprep.subr.bf16.mxu0 0
        %427 = vmatpush2.bf16.msra.mxu0 0
        %428 = vmatprep.subr.bf16.mxu0 0
        %429 = vmatpush2.bf16.msra.mxu0 0
        %430 = vmatprep.subr.bf16.mxu0 0
        %431 = vmatpush2.bf16.msra.mxu0 0
        %432 = vmatprep.subr.bf16.mxu0 0
        %433 = vmatpush2.bf16.msra.mxu0 0
        %434 = vmatprep.subr.bf16.mxu0 0
        %435 = vmatpush2.bf16.msra.mxu0 0
        %436 = vmatprep.mubr.bf16.mxu0 0
        %437 = vmatmul.mubr.bf16.gmra.mxu0 %v399
        %v438 = vpop.f32.mrf.mxu0
        %v439 = vadd.f32 0.0, %v438
        %v440 = vpop.f32.mrf.mxu0
        %v441 = vpop.f32.mrf.mxu0
        %v442 = vadd.f32 0.0, %v441
        %v443 = vpop.f32.mrf.mxu0
        %444 = vmatprep.mubr.bf16.mxu0 0
        %445 = vmatmul.mubr.bf16.gmra.mxu0 %v402
        %v446 = vpop.f32.mrf.mxu0
        %v447 = vadd.f32 0.0, %v446
        %v448 = vpop.f32.mrf.mxu0
        %v449 = vpop.f32.mrf.mxu0
        %v450 = vadd.f32 0.0, %v449
        %v451 = vpop.f32.mrf.mxu0
        %452 = vdwg.mxu0
        %v453 = vadd.f32 %v347, %v439
        %v454 = vadd.f32 %v348, %v442
        %v455 = vadd.f32 %v349, %v447
        %v456 = vadd.f32 %v350, %v450
        %457 = vst [vmem:[%s333] sm:$0xff] %v453
        %458 = vst [vmem:[%s333 + $0x8] sm:$0xff] %v454
        %459 = vst [vmem:[%s333 + $0x10] sm:$0xff] %v455
        %460 = vst [vmem:[%s333 + $0x18] sm:$0xff] %v456
        // Predicated region
        $region61: #{tpu_custom_call.1} parent=39 // pred_check
          %p461 = pneg %p339
        $region62: #{tpu_custom_call.1} parent=39 // pred_check_branch
          %463 = sbr.rel (%p461) target = $region64
        $region63: #{tpu_custom_call.1} parent=39 // pred_region
          %s464 = sld [smem:[#allocation3]]
          %s465 = ssub.f32 1.0, %s464
          %v466 = vld [vmem:[%s333] sm:$0xff]
          %v467 = vld [vmem:[%s333 + $0x8] sm:$0xff]
          %v468 = vld [vmem:[%s333 + $0x10] sm:$0xff]
          %v469 = vld [vmem:[%s333 + $0x18] sm:$0xff]
          %v470 = vstv %s465
          %v471 = vmul.f32 %v470, %v466
          %v472 = vmul.f32 %v470, %v467
          %v473 = vmul.f32 %v470, %v468
          %v474 = vmul.f32 %v470, %v469
          %v475 = vld [vmem:[%s298] sm:$0xff]
          %v476 = vld [vmem:[%s298 + $0x8] sm:$0xff]
          %v477 = vld [vmem:[%s298 + $0x10] sm:$0xff]
          %v478 = vld [vmem:[%s298 + $0x18] sm:$0xff]
          %v479 = vstv %s464
          %v480 = vmul.f32 %v479, %v475
          %v481 = vmul.f32 %v479, %v476
          %v482 = vmul.f32 %v479, %v477
          %v483 = vmul.f32 %v479, %v478
          %v484 = vadd.f32 %v471, %v480
          %v485 = vadd.f32 %v472, %v481
          %v486 = vadd.f32 %v473, %v482
          %v487 = vadd.f32 %v474, %v483
          %488 = vst [vmem:[%s333] sm:$0xff] %v484
          %489 = vst [vmem:[%s333 + $0x8] sm:$0xff] %v485
          %490 = vst [vmem:[%s333 + $0x10] sm:$0xff] %v486
          %491 = vst [vmem:[%s333 + $0x18] sm:$0xff] %v487
          %v492 = vld [vmem:[%s333] sm:$0xff]
          %v493 = vld [vmem:[%s333 + $0x8] sm:$0xff]
          %v494 = vld [vmem:[%s333 + $0x10] sm:$0xff]
          %v495 = vld [vmem:[%s333 + $0x18] sm:$0xff]
          %v496 = vld [vmem:[#allocation10] sm:$0xff]
          %v497 = vld [vmem:[#allocation10 + $0x8] sm:$0xff]
          %v498 = vld [vmem:[#allocation10 + $0x10] sm:$0xff]
          %v499 = vld [vmem:[#allocation10 + $0x18] sm:$0xff]
          %v500 = vld [vmem:[#allocation10 + $0x20] sm:$0xff]
          %v501 = vld [vmem:[#allocation10 + $0x28] sm:$0xff]
          %v502 = vld [vmem:[#allocation10 + $0x30] sm:$0xff]
          %v503 = vld [vmem:[#allocation10 + $0x38] sm:$0xff]
          %v504 = vld [vmem:[#allocation10 + $0x40] sm:$0xff]
          %v505 = vld [vmem:[#allocation10 + $0x48] sm:$0xff]
          %v506 = vld [vmem:[#allocation10 + $0x50] sm:$0xff]
          %v507 = vld [vmem:[#allocation10 + $0x58] sm:$0xff]
          %v508 = vld [vmem:[#allocation10 + $0x60] sm:$0xff]
          %v509 = vld [vmem:[#allocation10 + $0x68] sm:$0xff]
          %v510 = vld [vmem:[#allocation10 + $0x70] sm:$0xff]
          %v511 = vld [vmem:[#allocation10 + $0x78] sm:$0xff]
          %v512 = vld [vmem:[%s5] sm:$0x1]
          %v514 = vlaneseq
          %v515 = vshrl.u32 %v514, 7
          %v516 = vsub.s32 0, %v515
          %v517 = vrot.slane %v512, %v516
          %519 = vmatprep.subr.mxu0 0.0
          %520 = vmatpush1.msra.mxu0 %v511
          %521 = vmatprep.subr.mxu0 0.0
          %522 = vmatpush1.msra.mxu0 %v510
          %523 = vmatprep.subr.mxu0 0.0
          %524 = vmatpush1.msra.mxu0 %v509
          %525 = vmatprep.subr.mxu0 0.0
          %526 = vmatpush1.msra.mxu0 %v508
          %527 = vmatprep.subr.mxu0 0.0
          %528 = vmatpush1.msra.mxu0 %v507
          %529 = vmatprep.subr.mxu0 0.0
          %530 = vmatpush1.msra.mxu0 %v506
          %531 = vmatprep.subr.mxu0 0.0
          %532 = vmatpush1.msra.mxu0 %v505
          %533 = vmatprep.subr.mxu0 0.0
          %534 = vmatpush1.msra.mxu0 %v504
          %535 = vmatprep.subr.mxu0 0.0
          %536 = vmatpush1.msra.mxu0 %v503
          %537 = vmatprep.subr.mxu0 0.0
          %538 = vmatpush1.msra.mxu0 %v502
          %539 = vmatprep.subr.mxu0 0.0
          %540 = vmatpush1.msra.mxu0 %v501
          %541 = vmatprep.subr.mxu0 0.0
          %542 = vmatpush1.msra.mxu0 %v500
          %543 = vmatprep.subr.mxu0 0.0
          %544 = vmatpush1.msra.mxu0 %v499
          %545 = vmatprep.subr.mxu0 0.0
          %546 = vmatpush1.msra.mxu0 %v498
          %547 = vmatprep.subr.mxu0 0.0
          %548 = vmatpush1.msra.mxu0 %v497
          %549 = vmatprep.subr.mxu0 0.0
          %550 = vmatpush1.msra.mxu0 %v496
          %551 = vmatprep.subr.mxu0 0.0
          %552 = vmatpush2.msra.mxu0 0.0
          %553 = vmatprep.subr.mxu0 0.0
          %554 = vmatpush2.msra.mxu0 0.0
          %555 = vmatprep.subr.mxu0 0.0
          %556 = vmatpush2.msra.mxu0 0.0
          %557 = vmatprep.subr.mxu0 0.0
          %558 = vmatpush2.msra.mxu0 0.0
          %559 = vmatprep.subr.mxu0 0.0
          %560 = vmatpush2.msra.mxu0 0.0
          %561 = vmatprep.subr.mxu0 0.0
          %562 = vmatpush2.msra.mxu0 0.0
          %563 = vmatprep.subr.mxu0 0.0
          %564 = vmatpush2.msra.mxu0 0.0
          %565 = vmatprep.subr.mxu0 0.0
          %566 = vmatpush2.msra.mxu0 0.0
          %567 = vmatprep.subr.mxu0 0.0
          %568 = vmatpush2.msra.mxu0 0.0
          %569 = vmatprep.subr.mxu0 0.0
          %570 = vmatpush2.msra.mxu0 0.0
          %571 = vmatprep.subr.mxu0 0.0
          %572 = vmatpush2.msra.mxu0 0.0
          %573 = vmatprep.subr.mxu0 0.0
          %574 = vmatpush2.msra.mxu0 0.0
          %575 = vmatprep.subr.mxu0 0.0
          %576 = vmatpush2.msra.mxu0 0.0
          %577 = vmatprep.subr.mxu0 0.0
          %578 = vmatpush2.msra.mxu0 0.0
          %579 = vmatprep.subr.mxu0 0.0
          %580 = vmatpush2.msra.mxu0 0.0
          %581 = vmatprep.subr.mxu0 0.0
          %582 = vmatpush2.msra.mxu0 0.0
          %583 = vmatprep.mubr.f32.mxu0 0.0
          %584 = vmatmul.mubr.f32.gmra.mxu0 %v492
          %v585 = vpop.f32.mrf.mxu0
          %v586 = vadd.f32 %v517, %v585
          %v587 = vpop.f32.mrf.mxu0
          %588 = vmatprep.mubr.f32.mxu0 0.0
          %589 = vmatmul.mubr.f32.gmra.mxu0 %v493
          %v590 = vpop.f32.mrf.mxu0
          %v591 = vadd.f32 %v517, %v590
          %v592 = vpop.f32.mrf.mxu0
          %593 = vmatprep.mubr.f32.mxu0 0.0
          %594 = vmatmul.mubr.f32.gmra.mxu0 %v494
          %v595 = vpop.f32.mrf.mxu0
          %v596 = vadd.f32 %v517, %v595
          %v597 = vpop.f32.mrf.mxu0
          %598 = vmatprep.mubr.f32.mxu0 0.0
          %599 = vmatmul.mubr.f32.gmra.mxu0 %v495
          %v600 = vpop.f32.mrf.mxu0
          %v601 = vadd.f32 %v517, %v600
          %v602 = vpop.f32.mrf.mxu0
          %603 = vdwg.mxu0
          %604 = vst [vmem:[%s333] sm:$0xff] %v586
          %605 = vst [vmem:[%s333 + $0x8] sm:$0xff] %v591
          %606 = vst [vmem:[%s333 + $0x10] sm:$0xff] %v596
          %607 = vst [vmem:[%s333 + $0x18] sm:$0xff] %v601
        $region64: #{tpu_custom_call.1} parent=39 // pred_fallthru
          _
        %s608 = sand.u32 %s167, 1
        %s609 = scalar_lea.sflag [#allocation6], %s608
        %s610 = sand.u32 %s167, 1
        %s611 = smul.addr %s610, 32
        %s612 = scalar_lea.vmem [#allocation11], %s611
        // Predicated region
        $region65: #{tpu_custom_call.1} parent=39 // pred_check
          %p613 = pneg %p177
        $region66: #{tpu_custom_call.1} parent=39 // pred_check_branch
          %615 = sbr.rel (%p613) target = $region68
        $region67: #{tpu_custom_call.1} parent=39 // pred_region
          %s616 = smul.u32 4, %s29
          %s618 = ssub.s32 512, 512
          %619 = vsyncadd %s609, %s618
          %s620 = smul.addr %s616, 128
          %s621 = scalar_lea.hbm %s6, %s620
          %s622 = sshll.u32 %s612, 4
          %s623 = int_to_ptr.vmem [resolvable:$true] %s622
          %628 = dma.vmem_to_hbm [thread:$0]  %s623, 512, %s621, %s609, 128, 128, 8
        $region68: #{tpu_custom_call.1} parent=39 // pred_fallthru
          _
      $region40: #{tpu_custom_call.1} parent=5 // pred_fallthru
        _
      %p629 = scmp.le.s32.totalorder 2, %s20
      // Predicated region
      $region69: #{tpu_custom_call.1} parent=5 // pred_check
        %p630 = pneg %p629
      $region70: #{tpu_custom_call.1} parent=5 // pred_check_branch
        %632 = sbr.rel (%p630) target = $region72
      $region71: #{tpu_custom_call.1} parent=5 // pred_region
        %s633 = ssub.s32 %s20, 2
        // Predicated region
        $region73: #{tpu_custom_call.1} parent=71 // pred_check
          %p634 = pneg %p183
        $region74: #{tpu_custom_call.1} parent=71 // pred_check_branch
          %636 = sbr.rel (%p634) target = $region76
        $region75: #{tpu_custom_call.1} parent=71 // pred_region
          %s637 = sand.u32 %s168, 1
          %s638 = scalar_lea.sflag [#allocation6], %s637
          %s639 = sand.u32 %s168, 1
          %s640 = smul.addr %s639, 32
          %s641 = scalar_lea.vmem [#allocation11], %s640
          %642 = dma.done %s638, 512
        $region76: #{tpu_custom_call.1} parent=71 // pred_fallthru
          _
      $region72: #{tpu_custom_call.1} parent=5 // pred_fallthru
        _
    $region6: #{tpu_custom_call.1} parent=1 // loop_footer
      %s24 = sadd.s32 1, %s20
    $region7: #{tpu_custom_call.1} parent=1 // loop_footer_branch
      %19 = sbr.rel target = $region3
    $region8: #{tpu_custom_call.1} parent=1 // loop_exit
      _
    %643 = vsyncpa [#allocation5], 1
    %s644 = scalar_lea.sflag [#allocation5], 1
    %645 = vsyncpa %s644, 1
    %646 = vsyncpa [#allocation8], 1
    %647 = vsyncpa [#allocation6], 1
    %s648 = scalar_lea.sflag [#allocation6], 1
    %649 = vsyncpa %s648, 1

</llo_original>
